<compile_context>
chip_gen: v6e
topology: v6e:2x2x1
jax: 0.10.0
libtpu: 0.0.40
codegen_flags: <defaults>
</compile_context>

<pallas_src>
import functools

import jax
import jax.numpy as jnp
import numpy as np
from jax import lax
from jax.experimental import pallas as pl
from jax.experimental.pallas import tpu as pltpu


# ---------------------------------------------------------------------------
# Parameter / operator setup (plain numpy glue, deterministic)
# ---------------------------------------------------------------------------
_BLUR_TAPS = {
    1: [1.0],
    2: [1.0, 1.0],
    3: [1.0, 2.0, 1.0],
    4: [1.0, 3.0, 3.0, 1.0],
    5: [1.0, 4.0, 6.0, 4.0, 1.0],
    6: [1.0, 5.0, 10.0, 10.0, 5.0, 1.0],
    7: [1.0, 6.0, 15.0, 20.0, 15.0, 6.0, 1.0],
}


def _build_blur_downsample_matrix(length_in: int, stride: int, filt_size: int) -> np.ndarray:
    """B = A @ R : folds reflect-pad, separable blur taps and stride subsampling
    into a single (len_out, length_in) linear operator applied along one axis."""
    a = np.asarray(_BLUR_TAPS[filt_size], dtype=np.float64)
    a = a / a.sum()  # separable: 2-D filter = outer(a, a) / sum^2

    pad_l = int((filt_size - 1) / 2)
    pad_r = int(np.ceil((filt_size - 1) / 2))

    # PyTorch ReflectionPad2d requires input dim > pad (no edge repeat); guard it so
    # the operator never silently wraps for tiny spatial dims.
    if filt_size > 1:
        assert length_in > max(pad_l, pad_r), (
            f"reflect pad needs length_in > pad ({length_in} <= {max(pad_l, pad_r)})")

    length_pad = length_in + pad_l + pad_r

    # Reflect-pad selection matrix (no edge repeat).
    idx = np.concatenate([
        np.arange(pad_l, 0, -1),                       # left reflection
        np.arange(length_in),                          # body
        length_in - 2 - np.arange(pad_r),              # right reflection
    ]).astype(np.int64)
    R = np.zeros((length_pad, length_in), dtype=np.float64)
    R[np.arange(length_pad), idx] = 1.0

    # Strided 1-D blur as a matrix.
    length_out = (length_pad - filt_size) // stride + 1
    A = np.zeros((length_out, length_pad), dtype=np.float64)
    for i in range(length_out):
        A[i, i * stride: i * stride + filt_size] = a

    return (A @ R).astype(np.float32)


def _choose_channel_block(C: int, H: int, W: int, itemsize: int,
                          vmem_budget_bytes: int) -> int:
    """Largest divisor of C whose per-step VMEM footprint stays under budget.
    Rough model: double-buffered input slab + maxpool/blur intermediates ~ 5x slab."""
    per_channel = max(1, H * W * itemsize * 5)
    cmax = max(1, vmem_budget_bytes // per_channel)
    cblk = 1
    for d in range(1, C + 1):
        if C % d == 0 and d <= cmax:
            cblk = d
    return cblk


# ---------------------------------------------------------------------------
# Pallas kernel
# ---------------------------------------------------------------------------
def _maxblurpool_kernel(x_ref, bh_ref, bwt_ref, o_ref, *, pool_k, hm, wm):
    x = x_ref[0]                                   # (Cblk, H, W)
    cblk = x.shape[0]

    # --- k x k max pool, stride 1, VALID (ceil_mode=False), separable: ---
    # max over lane (W) shifts first, then sublane (H) shifts: 2*(k-1) maxes.
    rm = x[:, :, 0:wm]
    for dj in range(1, pool_k):
        rm = jnp.maximum(rm, x[:, :, dj:dj + wm])  # (Cblk, H, Wm)
    m = rm[:, 0:hm, :]
    for di in range(1, pool_k):
        m = jnp.maximum(m, rm[:, di:di + hm, :])   # (Cblk, Hm, Wm)

    m = m.astype(jnp.float32)

    # --- blur + reflect pad + stride, folded into two batched MXU matmuls ---
    # bwt is already transposed host-side: (Wm, Wo).  Broadcast the constant 1-D
    # operators over the channel block so both contractions are standard batched
    # matmuls (same structure as 'bqk,bkd->bqd').
    ho, _ = bh_ref.shape
    _, wo = bwt_ref.shape
    bwt_b = jnp.broadcast_to(bwt_ref[...], (cblk, wm, wo))   # (Cblk, Wm, Wo)
    bh_b = jnp.broadcast_to(bh_ref[...], (cblk, ho, hm))     # (Cblk, Ho, Hm)

    # t[c, p, j] = sum_q m[c, p, q] * bwt[q, j]
    t = lax.dot_general(m, bwt_b, (((2,), (1,)), ((0,), (0,))),
                        preferred_element_type=jnp.float32)  # (Cblk, Hm, Wo)
    # y[c, i, j] = sum_p bh[i, p] * t[c, p, j]
    y = lax.dot_general(bh_b, t, (((2,), (1,)), ((0,), (0,))),
                        preferred_element_type=jnp.float32)  # (Cblk, Ho, Wo)

    o_ref[0] = y.astype(o_ref.dtype)


def max_blur_pool2d(x, *, kernel_size: int, stride=None, filt_size: int = 3,
                    ceil_mode: bool = False, channel_block=None,
                    vmem_budget_bytes: int = 8 << 20, vmem_limit_bytes=None):
    """MaxBlurPool2d forward. x: (N, C, H, W), NCHW."""
    assert not ceil_mode, "ceil_mode=False (module default) is implemented"
    if stride is None:
        stride = kernel_size
    N, C, H, W = x.shape

    # After MaxPool2d(kernel_size, stride=1, ceil_mode=False):
    Hm, Wm = H - kernel_size + 1, W - kernel_size + 1
    bh = jnp.asarray(_build_blur_downsample_matrix(Hm, stride, filt_size))      # (Ho, Hm)
    bw = _build_blur_downsample_matrix(Wm, stride, filt_size)                   # (Wo, Wm)
    bwt = jnp.asarray(np.ascontiguousarray(bw.T))                               # (Wm, Wo)
    Ho, Wo = bh.shape[0], bwt.shape[1]

    # Channel blocking (generation-safe VMEM budget; override via channel_block).
    cblk = channel_block if channel_block is not None else _choose_channel_block(
        C, H, W, np.dtype(x.dtype).itemsize, vmem_budget_bytes)
    assert C % cblk == 0, (C, cblk)

    kernel = functools.partial(_maxblurpool_kernel, pool_k=kernel_size, hm=Hm, wm=Wm)

    compiler_params = pltpu.CompilerParams(
        dimension_semantics=("parallel", "parallel"),
        vmem_limit_bytes=vmem_limit_bytes)

    return pl.pallas_call(
        kernel,
        out_shape=jax.ShapeDtypeStruct((N, C, Ho, Wo), x.dtype),
        grid=(N, C // cblk),
        in_specs=[
            pl.BlockSpec((1, cblk, H, W), lambda n, c: (n, c, 0, 0)),
            pl.BlockSpec((Ho, Hm), lambda n, c: (0, 0)),
            pl.BlockSpec((Wm, Wo), lambda n, c: (0, 0)),
        ],
        out_specs=pl.BlockSpec((1, cblk, Ho, Wo), lambda n, c: (n, c, 0, 0)),
        compiler_params=compiler_params,
    )(x, bh, bwt)


# ---------------------------------------------------------------------------
# Pure-JAX reference (for verification only)
# ---------------------------------------------------------------------------
def _reference(x, *, kernel_size, stride, filt_size=3):
    N, C, H, W = x.shape
    m = lax.reduce_window(x, -jnp.inf, lax.max,
                          (1, 1, kernel_size, kernel_size),
                          (1, 1, 1, 1), "VALID")
    pad_l = int((filt_size - 1) / 2)
    pad_r = int(np.ceil((filt_size - 1) / 2))
    m = jnp.pad(m, ((0, 0), (0, 0), (pad_l, pad_r), (pad_l, pad_r)), mode="reflect")
    a = np.asarray(_BLUR_TAPS[filt_size], dtype=np.float32)
    filt2d = np.outer(a, a)
    filt2d = filt2d / filt2d.sum()
    w = jnp.asarray(np.tile(filt2d[None, None], (C, 1, 1, 1)))  # (C,1,F,F)
    return lax.conv_general_dilated(
        m, w, window_strides=(stride, stride), padding="VALID",
        dimension_numbers=("NCHW", "OIHW", "NCHW"), feature_group_count=C)


# ---------------------------------------------------------------------------
if __name__ == "__main__":
    N, C, H, W = 2, 4, 16, 16
    kernel_size = 2           # MaxBlurPool2d(kernel_size=2, channels=4) -> stride=2
    key = jax.random.PRNGKey(0)
    x = jax.random.normal(key, (N, C, H, W), dtype=jnp.float32)

    out = max_blur_pool2d(x, kernel_size=kernel_size, filt_size=3)
    out = jax.block_until_ready(out)

    ref = jax.block_until_ready(_reference(x, kernel_size=kernel_size,
                                           stride=kernel_size, filt_size=3))
    assert out.shape == (N, C, 8, 8), out.shape
    np.testing.assert_allclose(np.asarray(out), np.asarray(ref), rtol=1e-4, atol=1e-5)

    print("KERNEL_OK")
</pallas_src>

<mosaic_0001>
module attributes {stable_mosaic.version = 11 : i64} {
  func.func @_maxblurpool_kernel(%arg0: i32, %arg1: i32, %arg2: memref<1x4x16x16xf32, #tpu.memory_space<vmem>>, %arg3: memref<8x15xf32, #tpu.memory_space<vmem>>, %arg4: memref<15x8xf32, #tpu.memory_space<vmem>>, %arg5: memref<1x4x8x8xf32, #tpu.memory_space<vmem>>) attributes {dimension_semantics = [#tpu.dimension_semantics<parallel>, #tpu.dimension_semantics<parallel>], iteration_bounds = array<i64: 2, 1>, scalar_prefetch = 0 : i64, scratch_operands = 0 : i64, tpu.core_type = #tpu.core_type<tc>, window_params = [{transform_indices = @transform_0, window_bounds = array<i64: 1, 4, 16, 16>}, {pipeline_mode = #tpu.pipeline_mode<synchronous>, transform_indices = @transform_1, window_bounds = array<i64: 8, 15>}, {pipeline_mode = #tpu.pipeline_mode<synchronous>, transform_indices = @transform_2, window_bounds = array<i64: 15, 8>}, {transform_indices = @transform_3, window_bounds = array<i64: 1, 4, 8, 8>}]} {
    %c0 = arith.constant 0 : index
    %c0_0 = arith.constant 0 : index
    %c0_1 = arith.constant 0 : index
    %c0_2 = arith.constant 0 : index
    %0 = vector.load %arg2[%c0, %c0_0, %c0_1, %c0_2] : memref<1x4x16x16xf32, #tpu.memory_space<vmem>>, vector<1x4x16x16xf32>
    %1 = vector.shape_cast %0 : vector<1x4x16x16xf32> to vector<4x16x16xf32>
    %2 = vector.extract_strided_slice %1 {offsets = [0, 0, 0], sizes = [4, 16, 15], strides = [1, 1, 1]} : vector<4x16x16xf32> to vector<4x16x15xf32>
    %3 = vector.extract_strided_slice %1 {offsets = [0, 0, 1], sizes = [4, 16, 15], strides = [1, 1, 1]} : vector<4x16x16xf32> to vector<4x16x15xf32>
    %4 = arith.maximumf %2, %3 : vector<4x16x15xf32>
    %5 = vector.extract_strided_slice %4 {offsets = [0, 0, 0], sizes = [4, 15, 15], strides = [1, 1, 1]} : vector<4x16x15xf32> to vector<4x15x15xf32>
    %6 = vector.extract_strided_slice %4 {offsets = [0, 1, 0], sizes = [4, 15, 15], strides = [1, 1, 1]} : vector<4x16x15xf32> to vector<4x15x15xf32>
    %7 = arith.maximumf %5, %6 : vector<4x15x15xf32>
    %c0_3 = arith.constant 0 : index
    %c0_4 = arith.constant 0 : index
    %8 = vector.load %arg4[%c0_3, %c0_4] : memref<15x8xf32, #tpu.memory_space<vmem>>, vector<15x8xf32>
    %9 = vector.shape_cast %8 : vector<15x8xf32> to vector<1x15x8xf32>
    %10 = vector.broadcast %9 : vector<1x15x8xf32> to vector<4x15x8xf32>
    %c0_5 = arith.constant 0 : index
    %c0_6 = arith.constant 0 : index
    %11 = vector.load %arg3[%c0_5, %c0_6] : memref<8x15xf32, #tpu.memory_space<vmem>>, vector<8x15xf32>
    %12 = vector.shape_cast %11 : vector<8x15xf32> to vector<1x8x15xf32>
    %13 = vector.broadcast %12 : vector<1x8x15xf32> to vector<4x8x15xf32>
    %cst = arith.constant dense<0.000000e+00> : vector<4x15x8xf32>
    %14 = tpu.matmul %7, %10, %cst {dimension_numbers = #tpu.dot_dimension_numbers<[2], [1], [1], [2], [0, 0, 0, 1, 1, 2], [0], [0]>} : vector<4x15x15xf32>, vector<4x15x8xf32>, vector<4x15x8xf32> -> vector<4x15x8xf32>
    %cst_7 = arith.constant dense<0.000000e+00> : vector<4x8x8xf32>
    %15 = tpu.matmul %13, %14, %cst_7 {dimension_numbers = #tpu.dot_dimension_numbers<[2], [1], [1], [2], [0, 0, 0, 1, 1, 2], [0], [0]>} : vector<4x8x15xf32>, vector<4x15x8xf32>, vector<4x8x8xf32> -> vector<4x8x8xf32>
    %c0_8 = arith.constant 0 : index
    %c0_9 = arith.constant 0 : index
    %c0_10 = arith.constant 0 : index
    %c0_11 = arith.constant 0 : index
    %16 = vector.load %arg5[%c0_8, %c0_9, %c0_10, %c0_11] : memref<1x4x8x8xf32, #tpu.memory_space<vmem>>, vector<1x4x8x8xf32>
    %17 = vector.shape_cast %16 : vector<1x4x8x8xf32> to vector<4x8x8xf32>
    %18 = vector.shape_cast %15 : vector<4x8x8xf32> to vector<1x4x8x8xf32>
    tpu.vector_store %arg5[%c0_8, %c0_9, %c0_10, %c0_11], %18 {strides = array<i32>} : memref<1x4x8x8xf32, #tpu.memory_space<vmem>>, vector<1x4x8x8xf32>,
    return
  }
  func.func @transform_0(%arg0: i32, %arg1: i32) -> (i32, i32, i32, i32) {
    %c0_i32 = arith.constant 0 : i32
    %c0_i32_0 = arith.constant 0 : i32
    %c0_i32_1 = arith.constant 0 : i32
    return %arg0, %arg1, %c0_i32, %c0_i32_0 : i32, i32, i32, i32
  }
  func.func @transform_1(%arg0: i32, %arg1: i32) -> (i32, i32) {
    %c0_i32 = arith.constant 0 : i32
    %c0_i32_0 = arith.constant 0 : i32
    %c0_i32_1 = arith.constant 0 : i32
    return %c0_i32, %c0_i32_0 : i32, i32
  }
  func.func @transform_2(%arg0: i32, %arg1: i32) -> (i32, i32) {
    %c0_i32 = arith.constant 0 : i32
    %c0_i32_0 = arith.constant 0 : i32
    %c0_i32_1 = arith.constant 0 : i32
    return %c0_i32, %c0_i32_0 : i32, i32
  }
  func.func @transform_3(%arg0: i32, %arg1: i32) -> (i32, i32, i32, i32) {
    %c0_i32 = arith.constant 0 : i32
    %c0_i32_0 = arith.constant 0 : i32
    %c0_i32_1 = arith.constant 0 : i32
    return %arg0, %arg1, %c0_i32, %c0_i32_0 : i32, i32, i32, i32
  }
}

</mosaic_0001>

<llo_original>
// kernel: tpu_custom_call.1
$region0: #{tpu_custom_call.1}
  #allocation0 [shape = 'u32[]', space=smem, size = 0x4, offset = 0x4, fixed_abs, tag = 'smem constant byte address 0x4 - core index']
  #allocation1 [shape = 'u32[144,128]{1,0:T(1,128)}', space=vmem, size = 0x12000, scoped, tag = 'internal scratch']
  %s0 = inlined_call_operand.hbm [shape: f32[2,4,16,16], index: 0, kind: input, shape index: {}]
  %s1 = inlined_call_operand.vmem [shape: f32[8,15], index: 1, kind: input, shape index: {}]
  %s2 = inlined_call_operand.vmem [shape: f32[15,8], index: 2, kind: input, shape index: {}]
  %s3 = inlined_call_operand.hbm [shape: f32[2,4,8,8], index: 3, kind: output, shape index: {}]
  %s4 = sld [smem:[#allocation0]]
  $region49: #{tpu_custom_call.1} parent=0
    _
  %s6 = ssub.s32 1, %s4
  %s7 = scalar_select 0, %s6, %s4
  $region1: #{tpu_custom_call.1} parent=0
    #allocation2 [shape = 'u8[65536]{0}', space=vmem, size = 0x10000, scoped, tag = 'input window, operand 0']
    #allocation3 [shape = 's32[2]{0}', space=sflag, size = 0x8, scoped, tag = 'scoped memory for tpu_custom_call.1']
    #allocation4 [shape = 's32[2]{0}', space=sflag, size = 0x8, scoped, tag = 'scoped memory for tpu_custom_call.1']
    #allocation5 [shape = 'u8[32768]{0}', space=vmem, size = 0x8000, scoped, tag = 'output window, operand 0']
    %8 = vsyncpa [#allocation3], 0
    %s9 = scalar_lea.sflag [#allocation3], 1
    %10 = vsyncpa %s9, 0
    %11 = vsyncpa [#allocation4], 0
    %s12 = scalar_lea.sflag [#allocation4], 1
    %13 = vsyncpa %s12, 0
    loop: start=0, step=1, limit=4
    $region2: #{tpu_custom_call.1} parent=1 // loop_pre_header
      _
    $region3: #{tpu_custom_call.1} parent=1 // loop_header
      %s15 = sphi 0, %s19
      %p16 = scmp.ge.s32.totalorder %s15, 4
      %s22 = sphi 0, %s34
      %s23 = sphi 0, %s30
      %s24 = sphi 0, %s22
      %s25 = sphi 0, %s23
      %s26 = sphi 0, %s24
      %s27 = sphi 0, %s25
      %s39 = sphi 0, %s41
      %s42 = sphi 0, %s39
      %s43 = sphi 0, %s42
      %s59 = sphi 0, %s43
      %s63 = sphi 0, %s63
      %s65 = sphi 0, %s63
      %s66 = sphi 0, %s65
      %s80 = sphi 0, %s66
      %s84 = sphi 0, %s84
      %s86 = sphi 0, %s84
      %s87 = sphi 0, %s86
      %s101 = sphi 0, %s87
      %s109 = sphi 0, %s111
      %s112 = sphi 0, %s109
      %s113 = sphi 0, %s112
      %s129 = sphi 0, %s113
    $region4: #{tpu_custom_call.1} parent=1 // loop_header_branch
      %18 = sbr.rel (%p16) target = $region8
    $region5: #{tpu_custom_call.1} parent=1 // loop_body
      %s20 = ssub.s32 %s15, 1
      %s21 = ssub.s32 %s15, 2
      %s28 = sadd.s32 1, %s23
      %p29 = scmp.ge.s32.totalorder %s28, 1
      %s30 = scalar_select %p29, 0, %s28
      %s31 = sadd.s32 1, %s22
      %s32 = scalar_select %p29, %s31, %s22
      %p33 = scmp.ge.s32.totalorder %s32, 2
      %s34 = scalar_select %p33, 0, %s32
      %s35 = ssub.s32 %s22, %s34
      %s36 = ssub.s32 %s23, %s30
      %s37 = sor.u32 %s35, %s36
      %p38 = scmp.eq.s32.totalorder %s37, 0
      %s40 = sadd.s32 %s39, 1
      %s41 = scalar_select %p38, %s39, %s40
      %p44 = pneg %p38
      %p45 = scmp.eq.s32.totalorder %s15, 1
      %p46 = por %p44, %p45
      %p47 = scmp.ne.s32.totalorder %s39, %s42
      %p48 = scmp.eq.s32.totalorder %s15, 0
      %p49 = por %p47, %p48
      %p50 = scmp.ne.s32.totalorder %s39, %s42
      %p51 = scmp.eq.s32.totalorder %s20, 1
      %p52 = por %p50, %p51
      %p53 = scmp.ne.s32.totalorder %s42, %s43
      %p54 = scmp.eq.s32.totalorder %s20, 0
      %p55 = por %p53, %p54
      %p56 = scmp.ne.s32.totalorder %s42, %s43
      %p57 = scmp.eq.s32.totalorder %s21, 1
      %p58 = por %p56, %p57
      %p60 = scmp.ne.s32.totalorder %s43, %s59
      %p61 = scmp.eq.s32.totalorder %s21, 0
      %p62 = por %p60, %p61
      %s64 = sadd.s32 %s63, 1
      %p67 = scmp.eq.s32.totalorder %s15, 1
      %p68 = scmp.ne.s32.totalorder %s63, %s65
      %p69 = scmp.eq.s32.totalorder %s15, 0
      %p70 = por %p68, %p69
      %p71 = scmp.ne.s32.totalorder %s63, %s65
      %p72 = scmp.eq.s32.totalorder %s20, 1
      %p73 = por %p71, %p72
      %p74 = scmp.ne.s32.totalorder %s65, %s66
      %p75 = scmp.eq.s32.totalorder %s20, 0
      %p76 = por %p74, %p75
      %p77 = scmp.ne.s32.totalorder %s65, %s66
      %p78 = scmp.eq.s32.totalorder %s21, 1
      %p79 = por %p77, %p78
      %p81 = scmp.ne.s32.totalorder %s66, %s80
      %p82 = scmp.eq.s32.totalorder %s21, 0
      %p83 = por %p81, %p82
      %s85 = sadd.s32 %s84, 1
      %p88 = scmp.eq.s32.totalorder %s15, 1
      %p89 = scmp.ne.s32.totalorder %s84, %s86
      %p90 = scmp.eq.s32.totalorder %s15, 0
      %p91 = por %p89, %p90
      %p92 = scmp.ne.s32.totalorder %s84, %s86
      %p93 = scmp.eq.s32.totalorder %s20, 1
      %p94 = por %p92, %p93
      %p95 = scmp.ne.s32.totalorder %s86, %s87
      %p96 = scmp.eq.s32.totalorder %s20, 0
      %p97 = por %p95, %p96
      %p98 = scmp.ne.s32.totalorder %s86, %s87
      %p99 = scmp.eq.s32.totalorder %s21, 1
      %p100 = por %p98, %p99
      %p102 = scmp.ne.s32.totalorder %s87, %s101
      %p103 = scmp.eq.s32.totalorder %s21, 0
      %p104 = por %p102, %p103
      %s105 = ssub.s32 %s22, %s34
      %s106 = ssub.s32 %s23, %s30
      %s107 = sor.u32 %s105, %s106
      %p108 = scmp.eq.s32.totalorder %s107, 0
      %s110 = sadd.s32 %s109, 1
      %s111 = scalar_select %p108, %s109, %s110
      %p114 = pneg %p108
      %p115 = scmp.eq.s32.totalorder %s15, 1
      %p116 = por %p114, %p115
      %p117 = scmp.ne.s32.totalorder %s109, %s112
      %p118 = scmp.eq.s32.totalorder %s15, 0
      %p119 = por %p117, %p118
      %p120 = scmp.ne.s32.totalorder %s109, %s112
      %p121 = scmp.eq.s32.totalorder %s20, 1
      %p122 = por %p120, %p121
      %p123 = scmp.ne.s32.totalorder %s112, %s113
      %p124 = scmp.eq.s32.totalorder %s20, 0
      %p125 = por %p123, %p124
      %p126 = scmp.ne.s32.totalorder %s112, %s113
      %p127 = scmp.eq.s32.totalorder %s21, 1
      %p128 = por %p126, %p127
      %p130 = scmp.ne.s32.totalorder %s113, %s129
      %p131 = scmp.eq.s32.totalorder %s21, 0
      %p132 = por %p130, %p131
      %p133 = scmp.le.s32.totalorder 1, %s15
      %p134 = scmp.lt.s32.totalorder %s15, 3
      %p135 = pnand %p133, %p134
      %p136 = pneg %p135
      // Predicated region
      $region9: #{tpu_custom_call.1} parent=5 // pred_check
        _
      $region10: #{tpu_custom_call.1} parent=5 // pred_check_branch
        %138 = sbr.rel (%p135) target = $region12
      $region11: #{tpu_custom_call.1} parent=5 // pred_region
        %s139 = ssub.s32 %s15, 1
        // Predicated region
        $region13: #{tpu_custom_call.1} parent=11 // pred_check
          %p140 = pneg %p76
        $region14: #{tpu_custom_call.1} parent=11 // pred_check_branch
          %142 = sbr.rel (%p140) target = $region16
        $region15: #{tpu_custom_call.1} parent=11 // pred_region
          _
        $region16: #{tpu_custom_call.1} parent=11 // pred_fallthru
          _
        // Predicated region
        $region17: #{tpu_custom_call.1} parent=11 // pred_check
          %p143 = pneg %p97
        $region18: #{tpu_custom_call.1} parent=11 // pred_check_branch
          %145 = sbr.rel (%p143) target = $region20
        $region19: #{tpu_custom_call.1} parent=11 // pred_region
          _
        $region20: #{tpu_custom_call.1} parent=11 // pred_fallthru
          _
      $region12: #{tpu_custom_call.1} parent=5 // pred_fallthru
        _
      %p146 = scmp.lt.s32.totalorder %s15, 2
      // Predicated region
      $region21: #{tpu_custom_call.1} parent=5 // pred_check
        %p147 = pneg %p146
      $region22: #{tpu_custom_call.1} parent=5 // pred_check_branch
        %149 = sbr.rel (%p147) target = $region24
      $region23: #{tpu_custom_call.1} parent=5 // pred_region
        // Predicated region
        $region25: #{tpu_custom_call.1} parent=23 // pred_check
          %p150 = pneg %p49
        $region26: #{tpu_custom_call.1} parent=23 // pred_check_branch
          %152 = sbr.rel (%p150) target = $region28
        $region27: #{tpu_custom_call.1} parent=23 // pred_region
          %s153 = sand.u32 %s39, 1
          %s154 = scalar_lea.sflag [#allocation3], %s153
          %s155 = sand.u32 %s39, 1
          %s156 = smul.addr %s155, 64
          %s157 = scalar_lea.vmem [#allocation2], %s156
          %s158 = smul.u32 4, %s23
          %s160 = ssub.s32 1024, 1024
          %161 = vsyncadd %s154, %s160
          %s162 = smul.addr %s158, 2
          %s163 = smul.addr %s22, 8
          %s164 = sadd.s32 %s162, %s163
          %s165 = smul.addr %s164, 128
          %s166 = scalar_lea.hbm %s0, %s165
          %s167 = sshll.u32 %s157, 4
          %s168 = int_to_ptr.vmem [resolvable:$true] %s167
          %173 = dma.hbm_to_vmem [thread:$0]  %s166, 1024, %s168, %s154, 128, 128, 8
        $region28: #{tpu_custom_call.1} parent=23 // pred_fallthru
          _
      $region24: #{tpu_custom_call.1} parent=5 // pred_fallthru
        _
      %p174 = scmp.le.s32.totalorder 1, %s15
      %p175 = scmp.lt.s32.totalorder %s15, 3
      %p176 = pnand %p174, %p175
      %p177 = pneg %p176
      // Predicated region
      $region29: #{tpu_custom_call.1} parent=5 // pred_check
        _
      $region30: #{tpu_custom_call.1} parent=5 // pred_check_branch
        %179 = sbr.rel (%p176) target = $region32
      $region31: #{tpu_custom_call.1} parent=5 // pred_region
        %s180 = ssub.s32 %s15, 1
        %s181 = sand.u32 %s42, 1
        %s182 = scalar_lea.sflag [#allocation3], %s181
        %s183 = sand.u32 %s42, 1
        %s184 = smul.addr %s183, 64
        %s185 = scalar_lea.vmem [#allocation2], %s184
        // Predicated region
        $region33: #{tpu_custom_call.1} parent=31 // pred_check
          %p186 = pneg %p55
        $region34: #{tpu_custom_call.1} parent=31 // pred_check_branch
          %188 = sbr.rel (%p186) target = $region36
        $region35: #{tpu_custom_call.1} parent=31 // pred_region
          %189 = dma.done %s182, 1024
        $region36: #{tpu_custom_call.1} parent=31 // pred_fallthru
          _
        %s190 = sand.u32 %s42, 1
        %s191 = scalar_lea.sflag [#allocation3], %s190
        %s192 = sand.u32 %s42, 1
        %s193 = smul.addr %s192, 64
        %s194 = scalar_lea.vmem [#allocation2], %s193
        %p195 = pneg %p55
        %p196 = pneg %p52
        %p197 = pneg %p76
        %p198 = pneg %p73
        %p199 = pneg %p97
        %p200 = pneg %p94
        %p201 = pneg %p125
        %p202 = pneg %p122
        %s203 = sand.u32 %s112, 1
        %s204 = scalar_lea.sflag [#allocation4], %s203
        %s205 = sand.u32 %s112, 1
        %s206 = smul.addr %s205, 32
        %s207 = scalar_lea.vmem [#allocation5], %s206
        %s208 = smul.u32 4, %s25
        %s209 = smul.u32 4, %s25
        %v210 = vld [vmem:[%s185] sm:$0xff]
        %v211 = vld [vmem:[%s185 + $0x8] sm:$0xff]
        %v212 = vld [vmem:[%s185 + $0x10] sm:$0xff]
        %v213 = vld [vmem:[%s185 + $0x18] sm:$0xff]
        %v214 = vld [vmem:[%s185 + $0x20] sm:$0xff]
        %v215 = vld [vmem:[%s185 + $0x28] sm:$0xff]
        %v216 = vld [vmem:[%s185 + $0x30] sm:$0xff]
        %v217 = vld [vmem:[%s185 + $0x38] sm:$0xff]
        %226 = vrot.lane.b32.xlu0 %v210, 127
        %v227 = vpop.permute.xlu0 %226
        %228 = vrot.lane.b32.xlu0 %v211, 127
        %v229 = vpop.permute.xlu0 %228
        %230 = vrot.lane.b32.xlu0 %v212, 127
        %v231 = vpop.permute.xlu0 %230
        %232 = vrot.lane.b32.xlu0 %v213, 127
        %v233 = vpop.permute.xlu0 %232
        %234 = vrot.lane.b32.xlu0 %v214, 127
        %v235 = vpop.permute.xlu0 %234
        %236 = vrot.lane.b32.xlu0 %v215, 127
        %v237 = vpop.permute.xlu0 %236
        %238 = vrot.lane.b32.xlu0 %v216, 127
        %v239 = vpop.permute.xlu0 %238
        %240 = vrot.lane.b32.xlu0 %v217, 127
        %v241 = vpop.permute.xlu0 %240
        %v250 = vmax.f32 %v210, %v227
        %v251 = vmax.f32 %v211, %v229
        %v252 = vmax.f32 %v212, %v231
        %v253 = vmax.f32 %v213, %v233
        %v254 = vmax.f32 %v214, %v235
        %v255 = vmax.f32 %v215, %v237
        %v256 = vmax.f32 %v216, %v239
        %v257 = vmax.f32 %v217, %v241
        %vm266 = vcmask 1046528
        %v267 = vrot.slane %v250, 1
        %v268 = vrot.slane %v251, 1
        %v269 = vsel %vm266, %v267, %v268
        %v270 = vrot.slane %v252, 1
        %v271 = vrot.slane %v253, 1
        %v272 = vsel %vm266, %v270, %v271
        %v273 = vrot.slane %v254, 1
        %v274 = vrot.slane %v255, 1
        %v275 = vsel %vm266, %v273, %v274
        %v276 = vrot.slane %v256, 1
        %v277 = vrot.slane %v257, 1
        %v278 = vsel %vm266, %v276, %v277
        %v287 = vmax.f32 %v250, %v269
        %v288 = vmax.f32 %v251, %v268
        %v289 = vmax.f32 %v252, %v272
        %v290 = vmax.f32 %v253, %v271
        %v291 = vmax.f32 %v254, %v275
        %v292 = vmax.f32 %v255, %v274
        %v293 = vmax.f32 %v256, %v278
        %v294 = vmax.f32 %v257, %v277
        %v295 = vld [vmem:[%s2] sm:$0xff]
        %v296 = vld [vmem:[%s2 + $0x8] sm:$0x7f]
        %v297 = vld [vmem:[%s1] sm:$0xff]
        %vm298 = vcmask 121856
        %v300 = vsel %vm298, %v287, 0
        %v303 = vsel %vm298, %v288, 0
        %v306 = vsel %vm266, %v296, 0
        %308 = vmatprep.subr.mxu0 0.0
        %309 = vmatpush1.msra.mxu0 0.0
        %310 = vmatprep.subr.mxu0 0.0
        %311 = vmatpush1.msra.mxu0 0.0
        %312 = vmatprep.subr.mxu0 0.0
        %313 = vmatpush1.msra.mxu0 0.0
        %314 = vmatprep.subr.mxu0 0.0
        %315 = vmatpush1.msra.mxu0 0.0
        %316 = vmatprep.subr.mxu0 0.0
        %317 = vmatpush1.msra.mxu0 0.0
        %318 = vmatprep.subr.mxu0 0.0
        %319 = vmatpush1.msra.mxu0 0.0
        %320 = vmatprep.subr.mxu0 0.0
        %321 = vmatpush1.msra.mxu0 0.0
        %322 = vmatprep.subr.mxu0 0.0
        %323 = vmatpush1.msra.mxu0 0.0
        %324 = vmatprep.subr.mxu0 0.0
        %325 = vmatpush1.msra.mxu0 0.0
        %326 = vmatprep.subr.mxu0 0.0
        %327 = vmatpush1.msra.mxu0 0.0
        %328 = vmatprep.subr.mxu0 0.0
        %329 = vmatpush1.msra.mxu0 0.0
        %330 = vmatprep.subr.mxu0 0.0
        %331 = vmatpush1.msra.mxu0 0.0
        %332 = vmatprep.subr.mxu0 0.0
        %333 = vmatpush1.msra.mxu0 0.0
        %334 = vmatprep.subr.mxu0 0.0
        %335 = vmatpush1.msra.mxu0 0.0
        %336 = vmatprep.subr.mxu0 0.0
        %337 = vmatpush1.msra.mxu0 %v306
        %338 = vmatprep.subr.mxu0 0.0
        %339 = vmatpush1.msra.mxu0 %v295
        %340 = vmatprep.subr.mxu0 0.0
        %341 = vmatpush2.msra.mxu0 0.0
        %342 = vmatprep.subr.mxu0 0.0
        %343 = vmatpush2.msra.mxu0 0.0
        %344 = vmatprep.subr.mxu0 0.0
        %345 = vmatpush2.msra.mxu0 0.0
        %346 = vmatprep.subr.mxu0 0.0
        %347 = vmatpush2.msra.mxu0 0.0
        %348 = vmatprep.subr.mxu0 0.0
        %349 = vmatpush2.msra.mxu0 0.0
        %350 = vmatprep.subr.mxu0 0.0
        %351 = vmatpush2.msra.mxu0 0.0
        %352 = vmatprep.subr.mxu0 0.0
        %353 = vmatpush2.msra.mxu0 0.0
        %354 = vmatprep.subr.mxu0 0.0
        %355 = vmatpush2.msra.mxu0 0.0
        %356 = vmatprep.subr.mxu0 0.0
        %357 = vmatpush2.msra.mxu0 0.0
        %358 = vmatprep.subr.mxu0 0.0
        %359 = vmatpush2.msra.mxu0 0.0
        %360 = vmatprep.subr.mxu0 0.0
        %361 = vmatpush2.msra.mxu0 0.0
        %362 = vmatprep.subr.mxu0 0.0
        %363 = vmatpush2.msra.mxu0 0.0
        %364 = vmatprep.subr.mxu0 0.0
        %365 = vmatpush2.msra.mxu0 0.0
        %366 = vmatprep.subr.mxu0 0.0
        %367 = vmatpush2.msra.mxu0 0.0
        %368 = vmatprep.subr.mxu0 0.0
        %369 = vmatpush2.msra.mxu0 0.0
        %370 = vmatprep.subr.mxu0 0.0
        %371 = vmatpush2.msra.mxu0 0.0
        %372 = vmatprep.mubr.f32.mxu0 0.0
        %373 = vmatmul.mubr.f32.gmra.mxu0 %v300
        %v374 = vpop.f32.mrf.mxu0
        %v375 = vadd.f32 0.0, %v374
        %v376 = vpop.f32.mrf.mxu0
        %377 = vmatprep.mubr.f32.mxu0 0.0
        %378 = vmatmul.mubr.f32.gmra.mxu0 %v303
        %v379 = vpop.f32.mrf.mxu0
        %v380 = vadd.f32 0.0, %v379
        %v381 = vpop.f32.mrf.mxu0
        %382 = vdwg.mxu0
        %v384 = vsel %vm298, %v289, 0
        %v387 = vsel %vm298, %v290, 0
        %389 = vmatprep.subr.mxu0 0.0
        %390 = vmatpush1.msra.mxu0 0.0
        %391 = vmatprep.subr.mxu0 0.0
        %392 = vmatpush1.msra.mxu0 0.0
        %393 = vmatprep.subr.mxu0 0.0
        %394 = vmatpush1.msra.mxu0 0.0
        %395 = vmatprep.subr.mxu0 0.0
        %396 = vmatpush1.msra.mxu0 0.0
        %397 = vmatprep.subr.mxu0 0.0
        %398 = vmatpush1.msra.mxu0 0.0
        %399 = vmatprep.subr.mxu0 0.0
        %400 = vmatpush1.msra.mxu0 0.0
        %401 = vmatprep.subr.mxu0 0.0
        %402 = vmatpush1.msra.mxu0 0.0
        %403 = vmatprep.subr.mxu0 0.0
        %404 = vmatpush1.msra.mxu0 0.0
        %405 = vmatprep.subr.mxu0 0.0
        %406 = vmatpush1.msra.mxu0 0.0
        %407 = vmatprep.subr.mxu0 0.0
        %408 = vmatpush1.msra.mxu0 0.0
        %409 = vmatprep.subr.mxu0 0.0
        %410 = vmatpush1.msra.mxu0 0.0
        %411 = vmatprep.subr.mxu0 0.0
        %412 = vmatpush1.msra.mxu0 0.0
        %413 = vmatprep.subr.mxu0 0.0
        %414 = vmatpush1.msra.mxu0 0.0
        %415 = vmatprep.subr.mxu0 0.0
        %416 = vmatpush1.msra.mxu0 0.0
        %417 = vmatprep.subr.mxu0 0.0
        %418 = vmatpush1.msra.mxu0 %v306
        %419 = vmatprep.subr.mxu0 0.0
        %420 = vmatpush1.msra.mxu0 %v295
        %421 = vmatprep.subr.mxu0 0.0
        %422 = vmatpush2.msra.mxu0 0.0
        %423 = vmatprep.subr.mxu0 0.0
        %424 = vmatpush2.msra.mxu0 0.0
        %425 = vmatprep.subr.mxu0 0.0
        %426 = vmatpush2.msra.mxu0 0.0
        %427 = vmatprep.subr.mxu0 0.0
        %428 = vmatpush2.msra.mxu0 0.0
        %429 = vmatprep.subr.mxu0 0.0
        %430 = vmatpush2.msra.mxu0 0.0
        %431 = vmatprep.subr.mxu0 0.0
        %432 = vmatpush2.msra.mxu0 0.0
        %433 = vmatprep.subr.mxu0 0.0
        %434 = vmatpush2.msra.mxu0 0.0
        %435 = vmatprep.subr.mxu0 0.0
        %436 = vmatpush2.msra.mxu0 0.0
        %437 = vmatprep.subr.mxu0 0.0
        %438 = vmatpush2.msra.mxu0 0.0
        %439 = vmatprep.subr.mxu0 0.0
        %440 = vmatpush2.msra.mxu0 0.0
        %441 = vmatprep.subr.mxu0 0.0
        %442 = vmatpush2.msra.mxu0 0.0
        %443 = vmatprep.subr.mxu0 0.0
        %444 = vmatpush2.msra.mxu0 0.0
        %445 = vmatprep.subr.mxu0 0.0
        %446 = vmatpush2.msra.mxu0 0.0
        %447 = vmatprep.subr.mxu0 0.0
        %448 = vmatpush2.msra.mxu0 0.0
        %449 = vmatprep.subr.mxu0 0.0
        %450 = vmatpush2.msra.mxu0 0.0
        %451 = vmatprep.subr.mxu0 0.0
        %452 = vmatpush2.msra.mxu0 0.0
        %453 = vmatprep.mubr.f32.mxu0 0.0
        %454 = vmatmul.mubr.f32.gmra.mxu0 %v384
        %v455 = vpop.f32.mrf.mxu0
        %v456 = vadd.f32 0.0, %v455
        %v457 = vpop.f32.mrf.mxu0
        %458 = vmatprep.mubr.f32.mxu0 0.0
        %459 = vmatmul.mubr.f32.gmra.mxu0 %v387
        %v460 = vpop.f32.mrf.mxu0
        %v461 = vadd.f32 0.0, %v460
        %v462 = vpop.f32.mrf.mxu0
        %463 = vdwg.mxu0
        %v465 = vsel %vm298, %v291, 0
        %v468 = vsel %vm298, %v292, 0
        %470 = vmatprep.subr.mxu0 0.0
        %471 = vmatpush1.msra.mxu0 0.0
        %472 = vmatprep.subr.mxu0 0.0
        %473 = vmatpush1.msra.mxu0 0.0
        %474 = vmatprep.subr.mxu0 0.0
        %475 = vmatpush1.msra.mxu0 0.0
        %476 = vmatprep.subr.mxu0 0.0
        %477 = vmatpush1.msra.mxu0 0.0
        %478 = vmatprep.subr.mxu0 0.0
        %479 = vmatpush1.msra.mxu0 0.0
        %480 = vmatprep.subr.mxu0 0.0
        %481 = vmatpush1.msra.mxu0 0.0
        %482 = vmatprep.subr.mxu0 0.0
        %483 = vmatpush1.msra.mxu0 0.0
        %484 = vmatprep.subr.mxu0 0.0
        %485 = vmatpush1.msra.mxu0 0.0
        %486 = vmatprep.subr.mxu0 0.0
        %487 = vmatpush1.msra.mxu0 0.0
        %488 = vmatprep.subr.mxu0 0.0
        %489 = vmatpush1.msra.mxu0 0.0
        %490 = vmatprep.subr.mxu0 0.0
        %491 = vmatpush1.msra.mxu0 0.0
        %492 = vmatprep.subr.mxu0 0.0
        %493 = vmatpush1.msra.mxu0 0.0
        %494 = vmatprep.subr.mxu0 0.0
        %495 = vmatpush1.msra.mxu0 0.0
        %496 = vmatprep.subr.mxu0 0.0
        %497 = vmatpush1.msra.mxu0 0.0
        %498 = vmatprep.subr.mxu0 0.0
        %499 = vmatpush1.msra.mxu0 %v306
        %500 = vmatprep.subr.mxu0 0.0
        %501 = vmatpush1.msra.mxu0 %v295
        %502 = vmatprep.subr.mxu0 0.0
        %503 = vmatpush2.msra.mxu0 0.0
        %504 = vmatprep.subr.mxu0 0.0
        %505 = vmatpush2.msra.mxu0 0.0
        %506 = vmatprep.subr.mxu0 0.0
        %507 = vmatpush2.msra.mxu0 0.0
        %508 = vmatprep.subr.mxu0 0.0
        %509 = vmatpush2.msra.mxu0 0.0
        %510 = vmatprep.subr.mxu0 0.0
        %511 = vmatpush2.msra.mxu0 0.0
        %512 = vmatprep.subr.mxu0 0.0
        %513 = vmatpush2.msra.mxu0 0.0
        %514 = vmatprep.subr.mxu0 0.0
        %515 = vmatpush2.msra.mxu0 0.0
        %516 = vmatprep.subr.mxu0 0.0
        %517 = vmatpush2.msra.mxu0 0.0
        %518 = vmatprep.subr.mxu0 0.0
        %519 = vmatpush2.msra.mxu0 0.0
        %520 = vmatprep.subr.mxu0 0.0
        %521 = vmatpush2.msra.mxu0 0.0
        %522 = vmatprep.subr.mxu0 0.0
        %523 = vmatpush2.msra.mxu0 0.0
        %524 = vmatprep.subr.mxu0 0.0
        %525 = vmatpush2.msra.mxu0 0.0
        %526 = vmatprep.subr.mxu0 0.0
        %527 = vmatpush2.msra.mxu0 0.0
        %528 = vmatprep.subr.mxu0 0.0
        %529 = vmatpush2.msra.mxu0 0.0
        %530 = vmatprep.subr.mxu0 0.0
        %531 = vmatpush2.msra.mxu0 0.0
        %532 = vmatprep.subr.mxu0 0.0
        %533 = vmatpush2.msra.mxu0 0.0
        %534 = vmatprep.mubr.f32.mxu0 0.0
        %535 = vmatmul.mubr.f32.gmra.mxu0 %v465
        %v536 = vpop.f32.mrf.mxu0
        %v537 = vadd.f32 0.0, %v536
        %v538 = vpop.f32.mrf.mxu0
        %539 = vmatprep.mubr.f32.mxu0 0.0
        %540 = vmatmul.mubr.f32.gmra.mxu0 %v468
        %v541 = vpop.f32.mrf.mxu0
        %v542 = vadd.f32 0.0, %v541
        %v543 = vpop.f32.mrf.mxu0
        %544 = vdwg.mxu0
        %v546 = vsel %vm298, %v293, 0
        %v549 = vsel %vm298, %v294, 0
        %551 = vmatprep.subr.mxu0 0.0
        %552 = vmatpush1.msra.mxu0 0.0
        %553 = vmatprep.subr.mxu0 0.0
        %554 = vmatpush1.msra.mxu0 0.0
        %555 = vmatprep.subr.mxu0 0.0
        %556 = vmatpush1.msra.mxu0 0.0
        %557 = vmatprep.subr.mxu0 0.0
        %558 = vmatpush1.msra.mxu0 0.0
        %559 = vmatprep.subr.mxu0 0.0
        %560 = vmatpush1.msra.mxu0 0.0
        %561 = vmatprep.subr.mxu0 0.0
        %562 = vmatpush1.msra.mxu0 0.0
        %563 = vmatprep.subr.mxu0 0.0
        %564 = vmatpush1.msra.mxu0 0.0
        %565 = vmatprep.subr.mxu0 0.0
        %566 = vmatpush1.msra.mxu0 0.0
        %567 = vmatprep.subr.mxu0 0.0
        %568 = vmatpush1.msra.mxu0 0.0
        %569 = vmatprep.subr.mxu0 0.0
        %570 = vmatpush1.msra.mxu0 0.0
        %571 = vmatprep.subr.mxu0 0.0
        %572 = vmatpush1.msra.mxu0 0.0
        %573 = vmatprep.subr.mxu0 0.0
        %574 = vmatpush1.msra.mxu0 0.0
        %575 = vmatprep.subr.mxu0 0.0
        %576 = vmatpush1.msra.mxu0 0.0
        %577 = vmatprep.subr.mxu0 0.0
        %578 = vmatpush1.msra.mxu0 0.0
        %579 = vmatprep.subr.mxu0 0.0
        %580 = vmatpush1.msra.mxu0 %v306
        %581 = vmatprep.subr.mxu0 0.0
        %582 = vmatpush1.msra.mxu0 %v295
        %583 = vmatprep.subr.mxu0 0.0
        %584 = vmatpush2.msra.mxu0 0.0
        %585 = vmatprep.subr.mxu0 0.0
        %586 = vmatpush2.msra.mxu0 0.0
        %587 = vmatprep.subr.mxu0 0.0
        %588 = vmatpush2.msra.mxu0 0.0
        %589 = vmatprep.subr.mxu0 0.0
        %590 = vmatpush2.msra.mxu0 0.0
        %591 = vmatprep.subr.mxu0 0.0
        %592 = vmatpush2.msra.mxu0 0.0
        %593 = vmatprep.subr.mxu0 0.0
        %594 = vmatpush2.msra.mxu0 0.0
        %595 = vmatprep.subr.mxu0 0.0
        %596 = vmatpush2.msra.mxu0 0.0
        %597 = vmatprep.subr.mxu0 0.0
        %598 = vmatpush2.msra.mxu0 0.0
        %599 = vmatprep.subr.mxu0 0.0
        %600 = vmatpush2.msra.mxu0 0.0
        %601 = vmatprep.subr.mxu0 0.0
        %602 = vmatpush2.msra.mxu0 0.0
        %603 = vmatprep.subr.mxu0 0.0
        %604 = vmatpush2.msra.mxu0 0.0
        %605 = vmatprep.subr.mxu0 0.0
        %606 = vmatpush2.msra.mxu0 0.0
        %607 = vmatprep.subr.mxu0 0.0
        %608 = vmatpush2.msra.mxu0 0.0
        %609 = vmatprep.subr.mxu0 0.0
        %610 = vmatpush2.msra.mxu0 0.0
        %611 = vmatprep.subr.mxu0 0.0
        %612 = vmatpush2.msra.mxu0 0.0
        %613 = vmatprep.subr.mxu0 0.0
        %614 = vmatpush2.msra.mxu0 0.0
        %615 = vmatprep.mubr.f32.mxu0 0.0
        %616 = vmatmul.mubr.f32.gmra.mxu0 %v546
        %v617 = vpop.f32.mrf.mxu0
        %v618 = vadd.f32 0.0, %v617
        %v619 = vpop.f32.mrf.mxu0
        %620 = vmatprep.mubr.f32.mxu0 0.0
        %621 = vmatmul.mubr.f32.gmra.mxu0 %v549
        %v622 = vpop.f32.mrf.mxu0
        %v623 = vadd.f32 0.0, %v622
        %v624 = vpop.f32.mrf.mxu0
        %625 = vdwg.mxu0
        %v627 = vsel %vm298, %v297, 0
        %v630 = vsel %vm266, %v380, 0
        %632 = vmatprep.subr.mxu0 0.0
        %633 = vmatpush1.msra.mxu0 0.0
        %634 = vmatprep.subr.mxu0 0.0
        %635 = vmatpush1.msra.mxu0 0.0
        %636 = vmatprep.subr.mxu0 0.0
        %637 = vmatpush1.msra.mxu0 0.0
        %638 = vmatprep.subr.mxu0 0.0
        %639 = vmatpush1.msra.mxu0 0.0
        %640 = vmatprep.subr.mxu0 0.0
        %641 = vmatpush1.msra.mxu0 0.0
        %642 = vmatprep.subr.mxu0 0.0
        %643 = vmatpush1.msra.mxu0 0.0
        %644 = vmatprep.subr.mxu0 0.0
        %645 = vmatpush1.msra.mxu0 0.0
        %646 = vmatprep.subr.mxu0 0.0
        %647 = vmatpush1.msra.mxu0 0.0
        %648 = vmatprep.subr.mxu0 0.0
        %649 = vmatpush1.msra.mxu0 0.0
        %650 = vmatprep.subr.mxu0 0.0
        %651 = vmatpush1.msra.mxu0 0.0
        %652 = vmatprep.subr.mxu0 0.0
        %653 = vmatpush1.msra.mxu0 0.0
        %654 = vmatprep.subr.mxu0 0.0
        %655 = vmatpush1.msra.mxu0 0.0
        %656 = vmatprep.subr.mxu0 0.0
        %657 = vmatpush1.msra.mxu0 0.0
        %658 = vmatprep.subr.mxu0 0.0
        %659 = vmatpush1.msra.mxu0 0.0
        %660 = vmatprep.subr.mxu0 0.0
        %661 = vmatpush1.msra.mxu0 %v630
        %662 = vmatprep.subr.mxu0 0.0
        %663 = vmatpush1.msra.mxu0 %v375
        %664 = vmatprep.subr.mxu0 0.0
        %665 = vmatpush2.msra.mxu0 0.0
        %666 = vmatprep.subr.mxu0 0.0
        %667 = vmatpush2.msra.mxu0 0.0
        %668 = vmatprep.subr.mxu0 0.0
        %669 = vmatpush2.msra.mxu0 0.0
        %670 = vmatprep.subr.mxu0 0.0
        %671 = vmatpush2.msra.mxu0 0.0
        %672 = vmatprep.subr.mxu0 0.0
        %673 = vmatpush2.msra.mxu0 0.0
        %674 = vmatprep.subr.mxu0 0.0
        %675 = vmatpush2.msra.mxu0 0.0
        %676 = vmatprep.subr.mxu0 0.0
        %677 = vmatpush2.msra.mxu0 0.0
        %678 = vmatprep.subr.mxu0 0.0
        %679 = vmatpush2.msra.mxu0 0.0
        %680 = vmatprep.subr.mxu0 0.0
        %681 = vmatpush2.msra.mxu0 0.0
        %682 = vmatprep.subr.mxu0 0.0
        %683 = vmatpush2.msra.mxu0 0.0
        %684 = vmatprep.subr.mxu0 0.0
        %685 = vmatpush2.msra.mxu0 0.0
        %686 = vmatprep.subr.mxu0 0.0
        %687 = vmatpush2.msra.mxu0 0.0
        %688 = vmatprep.subr.mxu0 0.0
        %689 = vmatpush2.msra.mxu0 0.0
        %690 = vmatprep.subr.mxu0 0.0
        %691 = vmatpush2.msra.mxu0 0.0
        %692 = vmatprep.subr.mxu0 0.0
        %693 = vmatpush2.msra.mxu0 0.0
        %694 = vmatprep.subr.mxu0 0.0
        %695 = vmatpush2.msra.mxu0 0.0
        %696 = vmatprep.mubr.f32.mxu0 0.0
        %697 = vmatmul.mubr.f32.gmra.mxu0 %v627
        %v698 = vpop.f32.mrf.mxu0
        %v699 = vadd.f32 0.0, %v698
        %v700 = vpop.f32.mrf.mxu0
        %701 = vdwg.mxu0
        %v703 = vsel %vm266, %v461, 0
        %705 = vmatprep.subr.mxu0 0.0
        %706 = vmatpush1.msra.mxu0 0.0
        %707 = vmatprep.subr.mxu0 0.0
        %708 = vmatpush1.msra.mxu0 0.0
        %709 = vmatprep.subr.mxu0 0.0
        %710 = vmatpush1.msra.mxu0 0.0
        %711 = vmatprep.subr.mxu0 0.0
        %712 = vmatpush1.msra.mxu0 0.0
        %713 = vmatprep.subr.mxu0 0.0
        %714 = vmatpush1.msra.mxu0 0.0
        %715 = vmatprep.subr.mxu0 0.0
        %716 = vmatpush1.msra.mxu0 0.0
        %717 = vmatprep.subr.mxu0 0.0
        %718 = vmatpush1.msra.mxu0 0.0
        %719 = vmatprep.subr.mxu0 0.0
        %720 = vmatpush1.msra.mxu0 0.0
        %721 = vmatprep.subr.mxu0 0.0
        %722 = vmatpush1.msra.mxu0 0.0
        %723 = vmatprep.subr.mxu0 0.0
        %724 = vmatpush1.msra.mxu0 0.0
        %725 = vmatprep.subr.mxu0 0.0
        %726 = vmatpush1.msra.mxu0 0.0
        %727 = vmatprep.subr.mxu0 0.0
        %728 = vmatpush1.msra.mxu0 0.0
        %729 = vmatprep.subr.mxu0 0.0
        %730 = vmatpush1.msra.mxu0 0.0
        %731 = vmatprep.subr.mxu0 0.0
        %732 = vmatpush1.msra.mxu0 0.0
        %733 = vmatprep.subr.mxu0 0.0
        %734 = vmatpush1.msra.mxu0 %v703
        %735 = vmatprep.subr.mxu0 0.0
        %736 = vmatpush1.msra.mxu0 %v456
        %737 = vmatprep.subr.mxu0 0.0
        %738 = vmatpush2.msra.mxu0 0.0
        %739 = vmatprep.subr.mxu0 0.0
        %740 = vmatpush2.msra.mxu0 0.0
        %741 = vmatprep.subr.mxu0 0.0
        %742 = vmatpush2.msra.mxu0 0.0
        %743 = vmatprep.subr.mxu0 0.0
        %744 = vmatpush2.msra.mxu0 0.0
        %745 = vmatprep.subr.mxu0 0.0
        %746 = vmatpush2.msra.mxu0 0.0
        %747 = vmatprep.subr.mxu0 0.0
        %748 = vmatpush2.msra.mxu0 0.0
        %749 = vmatprep.subr.mxu0 0.0
        %750 = vmatpush2.msra.mxu0 0.0
        %751 = vmatprep.subr.mxu0 0.0
        %752 = vmatpush2.msra.mxu0 0.0
        %753 = vmatprep.subr.mxu0 0.0
        %754 = vmatpush2.msra.mxu0 0.0
        %755 = vmatprep.subr.mxu0 0.0
        %756 = vmatpush2.msra.mxu0 0.0
        %757 = vmatprep.subr.mxu0 0.0
        %758 = vmatpush2.msra.mxu0 0.0
        %759 = vmatprep.subr.mxu0 0.0
        %760 = vmatpush2.msra.mxu0 0.0
        %761 = vmatprep.subr.mxu0 0.0
        %762 = vmatpush2.msra.mxu0 0.0
        %763 = vmatprep.subr.mxu0 0.0
        %764 = vmatpush2.msra.mxu0 0.0
        %765 = vmatprep.subr.mxu0 0.0
        %766 = vmatpush2.msra.mxu0 0.0
        %767 = vmatprep.subr.mxu0 0.0
        %768 = vmatpush2.msra.mxu0 0.0
        %769 = vmatprep.mubr.f32.mxu0 0.0
        %770 = vmatmul.mubr.f32.gmra.mxu0 %v627
        %v771 = vpop.f32.mrf.mxu0
        %v772 = vadd.f32 0.0, %v771
        %v773 = vpop.f32.mrf.mxu0
        %774 = vdwg.mxu0
        %v776 = vsel %vm266, %v542, 0
        %778 = vmatprep.subr.mxu0 0.0
        %779 = vmatpush1.msra.mxu0 0.0
        %780 = vmatprep.subr.mxu0 0.0
        %781 = vmatpush1.msra.mxu0 0.0
        %782 = vmatprep.subr.mxu0 0.0
        %783 = vmatpush1.msra.mxu0 0.0
        %784 = vmatprep.subr.mxu0 0.0
        %785 = vmatpush1.msra.mxu0 0.0
        %786 = vmatprep.subr.mxu0 0.0
        %787 = vmatpush1.msra.mxu0 0.0
        %788 = vmatprep.subr.mxu0 0.0
        %789 = vmatpush1.msra.mxu0 0.0
        %790 = vmatprep.subr.mxu0 0.0
        %791 = vmatpush1.msra.mxu0 0.0
        %792 = vmatprep.subr.mxu0 0.0
        %793 = vmatpush1.msra.mxu0 0.0
        %794 = vmatprep.subr.mxu0 0.0
        %795 = vmatpush1.msra.mxu0 0.0
        %796 = vmatprep.subr.mxu0 0.0
        %797 = vmatpush1.msra.mxu0 0.0
        %798 = vmatprep.subr.mxu0 0.0
        %799 = vmatpush1.msra.mxu0 0.0
        %800 = vmatprep.subr.mxu0 0.0
        %801 = vmatpush1.msra.mxu0 0.0
        %802 = vmatprep.subr.mxu0 0.0
        %803 = vmatpush1.msra.mxu0 0.0
        %804 = vmatprep.subr.mxu0 0.0
        %805 = vmatpush1.msra.mxu0 0.0
        %806 = vmatprep.subr.mxu0 0.0
        %807 = vmatpush1.msra.mxu0 %v776
        %808 = vmatprep.subr.mxu0 0.0
        %809 = vmatpush1.msra.mxu0 %v537
        %810 = vmatprep.subr.mxu0 0.0
        %811 = vmatpush2.msra.mxu0 0.0
        %812 = vmatprep.subr.mxu0 0.0
        %813 = vmatpush2.msra.mxu0 0.0
        %814 = vmatprep.subr.mxu0 0.0
        %815 = vmatpush2.msra.mxu0 0.0
        %816 = vmatprep.subr.mxu0 0.0
        %817 = vmatpush2.msra.mxu0 0.0
        %818 = vmatprep.subr.mxu0 0.0
        %819 = vmatpush2.msra.mxu0 0.0
        %820 = vmatprep.subr.mxu0 0.0
        %821 = vmatpush2.msra.mxu0 0.0
        %822 = vmatprep.subr.mxu0 0.0
        %823 = vmatpush2.msra.mxu0 0.0
        %824 = vmatprep.subr.mxu0 0.0
        %825 = vmatpush2.msra.mxu0 0.0
        %826 = vmatprep.subr.mxu0 0.0
        %827 = vmatpush2.msra.mxu0 0.0
        %828 = vmatprep.subr.mxu0 0.0
        %829 = vmatpush2.msra.mxu0 0.0
        %830 = vmatprep.subr.mxu0 0.0
        %831 = vmatpush2.msra.mxu0 0.0
        %832 = vmatprep.subr.mxu0 0.0
        %833 = vmatpush2.msra.mxu0 0.0
        %834 = vmatprep.subr.mxu0 0.0
        %835 = vmatpush2.msra.mxu0 0.0
        %836 = vmatprep.subr.mxu0 0.0
        %837 = vmatpush2.msra.mxu0 0.0
        %838 = vmatprep.subr.mxu0 0.0
        %839 = vmatpush2.msra.mxu0 0.0
        %840 = vmatprep.subr.mxu0 0.0
        %841 = vmatpush2.msra.mxu0 0.0
        %842 = vmatprep.mubr.f32.mxu0 0.0
        %843 = vmatmul.mubr.f32.gmra.mxu0 %v627
        %v844 = vpop.f32.mrf.mxu0
        %v845 = vadd.f32 0.0, %v844
        %v846 = vpop.f32.mrf.mxu0
        %847 = vdwg.mxu0
        %v849 = vsel %vm266, %v623, 0
        %851 = vmatprep.subr.mxu0 0.0
        %852 = vmatpush1.msra.mxu0 0.0
        %853 = vmatprep.subr.mxu0 0.0
        %854 = vmatpush1.msra.mxu0 0.0
        %855 = vmatprep.subr.mxu0 0.0
        %856 = vmatpush1.msra.mxu0 0.0
        %857 = vmatprep.subr.mxu0 0.0
        %858 = vmatpush1.msra.mxu0 0.0
        %859 = vmatprep.subr.mxu0 0.0
        %860 = vmatpush1.msra.mxu0 0.0
        %861 = vmatprep.subr.mxu0 0.0
        %862 = vmatpush1.msra.mxu0 0.0
        %863 = vmatprep.subr.mxu0 0.0
        %864 = vmatpush1.msra.mxu0 0.0
        %865 = vmatprep.subr.mxu0 0.0
        %866 = vmatpush1.msra.mxu0 0.0
        %867 = vmatprep.subr.mxu0 0.0
        %868 = vmatpush1.msra.mxu0 0.0
        %869 = vmatprep.subr.mxu0 0.0
        %870 = vmatpush1.msra.mxu0 0.0
        %871 = vmatprep.subr.mxu0 0.0
        %872 = vmatpush1.msra.mxu0 0.0
        %873 = vmatprep.subr.mxu0 0.0
        %874 = vmatpush1.msra.mxu0 0.0
        %875 = vmatprep.subr.mxu0 0.0
        %876 = vmatpush1.msra.mxu0 0.0
        %877 = vmatprep.subr.mxu0 0.0
        %878 = vmatpush1.msra.mxu0 0.0
        %879 = vmatprep.subr.mxu0 0.0
        %880 = vmatpush1.msra.mxu0 %v849
        %881 = vmatprep.subr.mxu0 0.0
        %882 = vmatpush1.msra.mxu0 %v618
        %883 = vmatprep.subr.mxu0 0.0
        %884 = vmatpush2.msra.mxu0 0.0
        %885 = vmatprep.subr.mxu0 0.0
        %886 = vmatpush2.msra.mxu0 0.0
        %887 = vmatprep.subr.mxu0 0.0
        %888 = vmatpush2.msra.mxu0 0.0
        %889 = vmatprep.subr.mxu0 0.0
        %890 = vmatpush2.msra.mxu0 0.0
        %891 = vmatprep.subr.mxu0 0.0
        %892 = vmatpush2.msra.mxu0 0.0
        %893 = vmatprep.subr.mxu0 0.0
        %894 = vmatpush2.msra.mxu0 0.0
        %895 = vmatprep.subr.mxu0 0.0
        %896 = vmatpush2.msra.mxu0 0.0
        %897 = vmatprep.subr.mxu0 0.0
        %898 = vmatpush2.msra.mxu0 0.0
        %899 = vmatprep.subr.mxu0 0.0
        %900 = vmatpush2.msra.mxu0 0.0
        %901 = vmatprep.subr.mxu0 0.0
        %902 = vmatpush2.msra.mxu0 0.0
        %903 = vmatprep.subr.mxu0 0.0
        %904 = vmatpush2.msra.mxu0 0.0
        %905 = vmatprep.subr.mxu0 0.0
        %906 = vmatpush2.msra.mxu0 0.0
        %907 = vmatprep.subr.mxu0 0.0
        %908 = vmatpush2.msra.mxu0 0.0
        %909 = vmatprep.subr.mxu0 0.0
        %910 = vmatpush2.msra.mxu0 0.0
        %911 = vmatprep.subr.mxu0 0.0
        %912 = vmatpush2.msra.mxu0 0.0
        %913 = vmatprep.subr.mxu0 0.0
        %914 = vmatpush2.msra.mxu0 0.0
        %915 = vmatprep.mubr.f32.mxu0 0.0
        %916 = vmatmul.mubr.f32.gmra.mxu0 %v627
        %v917 = vpop.f32.mrf.mxu0
        %v918 = vadd.f32 0.0, %v917
        %v919 = vpop.f32.mrf.mxu0
        %920 = vdwg.mxu0
        %vm921 = vcmask 64512
        %922 = vst.msk [vmem:[%s207] sm:$0xff] %vm921, %v699
        %923 = vst.msk [vmem:[%s207 + $0x8] sm:$0xff] %vm921, %v772
        %924 = vst.msk [vmem:[%s207 + $0x10] sm:$0xff] %vm921, %v845
        %925 = vst.msk [vmem:[%s207 + $0x18] sm:$0xff] %vm921, %v918
        %s926 = sand.u32 %s112, 1
        %s927 = scalar_lea.sflag [#allocation4], %s926
        %s928 = sand.u32 %s112, 1
        %s929 = smul.addr %s928, 32
        %s930 = scalar_lea.vmem [#allocation5], %s929
        // Predicated region
        $region37: #{tpu_custom_call.1} parent=31 // pred_check
          %p931 = pneg %p122
        $region38: #{tpu_custom_call.1} parent=31 // pred_check_branch
          %933 = sbr.rel (%p931) target = $region40
        $region39: #{tpu_custom_call.1} parent=31 // pred_region
          %s934 = smul.u32 4, %s25
          %s936 = ssub.s32 512, 512
          %937 = vsyncadd %s927, %s936
          %s938 = smul.addr %s24, 4
          %s939 = sadd.s32 %s934, %s938
          %s940 = smul.addr %s939, 128
          %s941 = scalar_lea.hbm %s3, %s940
          %s942 = sshll.u32 %s930, 4
          %s943 = int_to_ptr.vmem [resolvable:$true] %s942
          %948 = dma.vmem_to_hbm [thread:$0]  %s943, 512, %s941, %s927, 128, 128, 8
        $region40: #{tpu_custom_call.1} parent=31 // pred_fallthru
          _
      $region32: #{tpu_custom_call.1} parent=5 // pred_fallthru
        _
      %p949 = scmp.le.s32.totalorder 2, %s15
      // Predicated region
      $region41: #{tpu_custom_call.1} parent=5 // pred_check
        %p950 = pneg %p949
      $region42: #{tpu_custom_call.1} parent=5 // pred_check_branch
        %952 = sbr.rel (%p950) target = $region44
      $region43: #{tpu_custom_call.1} parent=5 // pred_region
        %s953 = ssub.s32 %s15, 2
        // Predicated region
        $region45: #{tpu_custom_call.1} parent=43 // pred_check
          %p954 = pneg %p128
        $region46: #{tpu_custom_call.1} parent=43 // pred_check_branch
          %956 = sbr.rel (%p954) target = $region48
        $region47: #{tpu_custom_call.1} parent=43 // pred_region
          %s957 = sand.u32 %s113, 1
          %s958 = scalar_lea.sflag [#allocation4], %s957
          %s959 = sand.u32 %s113, 1
          %s960 = smul.addr %s959, 32
          %s961 = scalar_lea.vmem [#allocation5], %s960
          %962 = dma.done %s958, 512
        $region48: #{tpu_custom_call.1} parent=43 // pred_fallthru
          _
      $region44: #{tpu_custom_call.1} parent=5 // pred_fallthru
        _
    $region6: #{tpu_custom_call.1} parent=1 // loop_footer
      %s19 = sadd.s32 1, %s15
    $region7: #{tpu_custom_call.1} parent=1 // loop_footer_branch
      %14 = sbr.rel target = $region3
    $region8: #{tpu_custom_call.1} parent=1 // loop_exit
      _
    %963 = vsyncpa [#allocation3], 1
    %s964 = scalar_lea.sflag [#allocation3], 1
    %965 = vsyncpa %s964, 1
    %966 = vsyncpa [#allocation4], 1
    %s967 = scalar_lea.sflag [#allocation4], 1
    %968 = vsyncpa %s967, 1

</llo_original>
